<compile_context>
chip_gen: v7x
topology: tpu7x:2x2x1
jax: 0.10.0
libtpu: 0.0.40
codegen_flags: <defaults>
</compile_context>

<pallas_src>
import jax
import jax.numpy as jnp
from jax.experimental import pallas as pl
from jax.experimental.pallas import tpu as pltpu


def loblock_kernel(x_ref, k1_ref, k2_ref, w_ref, b_ref, o_ref):
    # x_ref: (1, C, HW) block (one batch element), HW on lanes.
    x = x_ref[0]                                                        # (C, HW) f32

    # --- spatial transform: flatten(P @ X_c @ Q) = flatten(X_c) @ K1 ---
    t = jnp.dot(x, k1_ref[...], preferred_element_type=jnp.float32)    # (C, HW)

    # --- grouped 1x1 conv (block-diag dense weight) + folded BN + bias ---
    y = jnp.dot(w_ref[...], t, preferred_element_type=jnp.float32) + b_ref[...]

    # --- ReLU ---
    y = jnp.maximum(y, 0.0)

    # --- inverse spatial transform: flatten(P^T @ Y_c @ Q^T) = flatten(Y_c) @ K2 ---
    z = jnp.dot(y, k2_ref[...], preferred_element_type=jnp.float32)    # (C, HW)

    # --- residual ---
    o_ref[0] = (x + z).astype(o_ref.dtype)


def loblock_forward(x_nchw, params, *, groups=2, eps=1e-5):
    """x_nchw: (B, C, H, W) float32, PyTorch NCHW convention."""
    P_raw, Q_raw, w_group, b_conv, gamma, beta, run_mean, run_var = params
    b, c, h, w = x_nchw.shape
    hw = h * w
    cg = c // groups

    # Re-orthogonalize P / Q (the PyTorch forward does this under no_grad).
    P = jnp.linalg.qr(P_raw)[0]                                  # (h, h)
    Q = jnp.linalg.qr(Q_raw)[0]                                  # (w, w)

    # Kronecker-fold the two-sided spatial transforms into (HW, HW)
    # right-multiplies on the row-major-flattened spatial axis:
    #   flatten(P X Q)      = flatten(X) @ kron(P^T, Q)
    #   flatten(P^T Y Q^T)  = flatten(Y) @ kron(P,   Q^T)   ( = K1^T )
    K1 = jnp.kron(P.T, Q).astype(jnp.float32)                    # (hw, hw)
    K2 = jnp.kron(P, Q.T).astype(jnp.float32)                    # (hw, hw)

    # Dense block-diagonal grouped-conv weight with inference BatchNorm and
    # the conv bias folded in (exact).
    blocks = [w_group[g * cg:(g + 1) * cg] for g in range(groups)]   # (cg, cg) each
    Wd = jax.scipy.linalg.block_diag(*blocks)                        # (C, C)
    s = gamma / jnp.sqrt(run_var + eps)
    Wfold = (s[:, None] * Wd).astype(jnp.float32)                    # (C, C)
    bfold = (s * b_conv + (beta - run_mean * s)).reshape(c, 1).astype(jnp.float32)

    # NCHW -> (B, C, HW): free reshape, no transpose.
    x_flat = x_nchw.reshape(b, c, hw).astype(jnp.float32)

    out_flat = pl.pallas_call(
        loblock_kernel,
        out_shape=jax.ShapeDtypeStruct((b, c, hw), jnp.float32),
        grid=(b,),
        in_specs=[
            pl.BlockSpec((1, c, hw), lambda i: (i, 0, 0)),   # x, one batch per step
            pl.BlockSpec((hw, hw), lambda i: (0, 0)),        # K1 (VMEM-resident)
            pl.BlockSpec((hw, hw), lambda i: (0, 0)),        # K2 (VMEM-resident)
            pl.BlockSpec((c, c), lambda i: (0, 0)),          # folded conv+BN weight
            pl.BlockSpec((c, 1), lambda i: (0, 0)),          # folded bias/shift
        ],
        out_specs=pl.BlockSpec((1, c, hw), lambda i: (i, 0, 0)),
        compiler_params=pltpu.CompilerParams(
            dimension_semantics=("parallel",),
            vmem_limit_bytes=64 << 20,
        ),
    )(x_flat, K1, K2, Wfold, bfold)

    return out_flat.reshape(b, c, h, w)


def reference(x, params, *, groups=2, eps=1e-5):
    """Pure-JAX reference matching the PyTorch forward (NCHW, inference BN)."""
    P_raw, Q_raw, w_group, b_conv, gamma, beta, run_mean, run_var = params
    b, c, h, w = x.shape
    cg = c // groups
    P = jnp.linalg.qr(P_raw)[0]
    Q = jnp.linalg.qr(Q_raw)[0]

    # trans = P @ x @ Q  (per batch, per channel)
    t = jnp.einsum('ik,bckl->bcil', P, x, precision='highest')
    t = jnp.einsum('bckl,lj->bckj', t, Q, precision='highest')

    # grouped 1x1 conv
    outs = []
    for g in range(groups):
        tg = t[:, g * cg:(g + 1) * cg]                       # (b, cg, h, w)
        wg = w_group[g * cg:(g + 1) * cg]                    # (cg, cg): out x in
        outs.append(jnp.einsum('oc,bchw->bohw', wg, tg, precision='highest'))
    y = jnp.concatenate(outs, axis=1) + b_conv.reshape(1, c, 1, 1)

    # BatchNorm (inference, running stats) + ReLU
    s = gamma / jnp.sqrt(run_var + eps)
    y = y * s.reshape(1, c, 1, 1) + (beta - run_mean * s).reshape(1, c, 1, 1)
    y = jnp.maximum(y, 0.0)

    # back transform: P^T @ y @ Q^T
    z = jnp.einsum('ki,bckl->bcil', P, y, precision='highest')
    z = jnp.einsum('bckl,jl->bckj', z, Q, precision='highest')
    return x + z


if __name__ == "__main__":
    key = jax.random.PRNGKey(0)
    b, c, h, w = 2, 16, 16, 16
    groups = 2
    cg = c // groups
    eps = 1e-5

    keys = jax.random.split(key, 8)
    x = jax.random.normal(keys[0], (b, c, h, w), jnp.float32)

    # source_P / source_Q: random, orthogonalized in the forward pass.
    P_raw = jax.random.normal(keys[1], (h, h), jnp.float32)
    Q_raw = jax.random.normal(keys[2], (w, w), jnp.float32)

    # grouped 1x1 conv: groups-identity init (as in _init_conv with
    # groups_identity_init=True) plus a small perturbation so the
    # channel-mixing / bias-folding paths are actually exercised.
    w_group = (jnp.tile(jnp.eye(cg, dtype=jnp.float32), (groups, 1))
               + 0.01 * jax.random.normal(keys[3], (c, cg), jnp.float32))
    b_conv = 0.01 * jax.random.normal(keys[4], (c,), jnp.float32)

    # BatchNorm (inference-mode running stats, folded in the kernel).
    gamma = 1.0 + 0.1 * jax.random.normal(keys[5], (c,), jnp.float32)
    beta = 0.1 * jax.random.normal(keys[6], (c,), jnp.float32)
    run_mean = 0.1 * jax.random.normal(keys[7], (c,), jnp.float32)
    run_var = jnp.ones((c,), jnp.float32)

    params = (P_raw, Q_raw, w_group, b_conv, gamma, beta, run_mean, run_var)

    out = loblock_forward(x, params, groups=groups, eps=eps)
    out = jax.block_until_ready(out)

    ref = reference(x, params, groups=groups, eps=eps)
    assert out.shape == x.shape
    max_err = float(jnp.max(jnp.abs(out - ref)))
    assert max_err < 5e-3, f"mismatch vs reference: {max_err}"
    print("KERNEL_OK")
</pallas_src>

<mosaic_0001>
module attributes {stable_mosaic.version = 11 : i64} {
  func.func @loblock_kernel(%arg0: i32, %arg1: memref<1x16x256xf32, #tpu.memory_space<vmem>>, %arg2: memref<256x256xf32, #tpu.memory_space<vmem>>, %arg3: memref<256x256xf32, #tpu.memory_space<vmem>>, %arg4: memref<16x16xf32, #tpu.memory_space<vmem>>, %arg5: memref<16x1xf32, #tpu.memory_space<vmem>>, %arg6: memref<1x16x256xf32, #tpu.memory_space<vmem>>) attributes {dimension_semantics = [#tpu.dimension_semantics<parallel>], iteration_bounds = array<i64: 2>, scalar_prefetch = 0 : i64, scratch_operands = 0 : i64, tpu.core_type = #tpu.core_type<tc>, window_params = [{transform_indices = @transform_0, window_bounds = array<i64: 1, 16, 256>}, {pipeline_mode = #tpu.pipeline_mode<synchronous>, transform_indices = @transform_1, window_bounds = array<i64: 256, 256>}, {pipeline_mode = #tpu.pipeline_mode<synchronous>, transform_indices = @transform_2, window_bounds = array<i64: 256, 256>}, {pipeline_mode = #tpu.pipeline_mode<synchronous>, transform_indices = @transform_3, window_bounds = array<i64: 16, 16>}, {pipeline_mode = #tpu.pipeline_mode<synchronous>, transform_indices = @transform_4, window_bounds = array<i64: 16, 1>}, {transform_indices = @transform_5, window_bounds = array<i64: 1, 16, 256>}]} {
    %c0 = arith.constant 0 : index
    %c0_0 = arith.constant 0 : index
    %c0_1 = arith.constant 0 : index
    %0 = vector.load %arg1[%c0, %c0_0, %c0_1] : memref<1x16x256xf32, #tpu.memory_space<vmem>>, vector<1x16x256xf32>
    %1 = vector.shape_cast %0 : vector<1x16x256xf32> to vector<16x256xf32>
    %c0_2 = arith.constant 0 : index
    %c0_3 = arith.constant 0 : index
    %2 = vector.load %arg2[%c0_2, %c0_3] : memref<256x256xf32, #tpu.memory_space<vmem>>, vector<256x256xf32>
    %cst = arith.constant dense<0.000000e+00> : vector<16x256xf32>
    %3 = tpu.matmul %1, %2, %cst {dimension_numbers = #tpu.dot_dimension_numbers<[1], [0], [0], [1], [0, 0, 1, 1], [], []>} : vector<16x256xf32>, vector<256x256xf32>, vector<16x256xf32> -> vector<16x256xf32>
    %c0_4 = arith.constant 0 : index
    %c0_5 = arith.constant 0 : index
    %4 = vector.load %arg4[%c0_4, %c0_5] : memref<16x16xf32, #tpu.memory_space<vmem>>, vector<16x16xf32>
    %cst_6 = arith.constant dense<0.000000e+00> : vector<16x256xf32>
    %5 = tpu.matmul %4, %3, %cst_6 {dimension_numbers = #tpu.dot_dimension_numbers<[1], [0], [0], [1], [0, 0, 1, 1], [], []>} : vector<16x16xf32>, vector<16x256xf32>, vector<16x256xf32> -> vector<16x256xf32>
    %c0_7 = arith.constant 0 : index
    %c0_8 = arith.constant 0 : index
    %6 = vector.load %arg5[%c0_7, %c0_8] : memref<16x1xf32, #tpu.memory_space<vmem>>, vector<16x1xf32>
    %7 = vector.broadcast %6 : vector<16x1xf32> to vector<16x256xf32>
    %8 = arith.addf %5, %7 : vector<16x256xf32>
    %cst_9 = arith.constant 0.000000e+00 : f32
    %9 = vector.broadcast %cst_9 : f32 to vector<16x256xf32>
    %10 = arith.maximumf %8, %9 : vector<16x256xf32>
    %c0_10 = arith.constant 0 : index
    %c0_11 = arith.constant 0 : index
    %11 = vector.load %arg3[%c0_10, %c0_11] : memref<256x256xf32, #tpu.memory_space<vmem>>, vector<256x256xf32>
    %cst_12 = arith.constant dense<0.000000e+00> : vector<16x256xf32>
    %12 = tpu.matmul %10, %11, %cst_12 {dimension_numbers = #tpu.dot_dimension_numbers<[1], [0], [0], [1], [0, 0, 1, 1], [], []>} : vector<16x256xf32>, vector<256x256xf32>, vector<16x256xf32> -> vector<16x256xf32>
    %13 = arith.addf %1, %12 : vector<16x256xf32>
    %c0_13 = arith.constant 0 : index
    %c0_14 = arith.constant 0 : index
    %c0_15 = arith.constant 0 : index
    %14 = vector.load %arg6[%c0_13, %c0_14, %c0_15] : memref<1x16x256xf32, #tpu.memory_space<vmem>>, vector<1x16x256xf32>
    %15 = vector.shape_cast %14 : vector<1x16x256xf32> to vector<16x256xf32>
    %16 = vector.shape_cast %13 : vector<16x256xf32> to vector<1x16x256xf32>
    tpu.vector_store %arg6[%c0_13, %c0_14, %c0_15], %16 {strides = array<i32>} : memref<1x16x256xf32, #tpu.memory_space<vmem>>, vector<1x16x256xf32>,
    return
  }
  func.func @transform_0(%arg0: i32) -> (i32, i32, i32) {
    %c0_i32 = arith.constant 0 : i32
    %c0_i32_0 = arith.constant 0 : i32
    %c0_i32_1 = arith.constant 0 : i32
    return %arg0, %c0_i32, %c0_i32_0 : i32, i32, i32
  }
  func.func @transform_1(%arg0: i32) -> (i32, i32) {
    %c0_i32 = arith.constant 0 : i32
    %c0_i32_0 = arith.constant 0 : i32
    %c0_i32_1 = arith.constant 0 : i32
    return %c0_i32, %c0_i32_0 : i32, i32
  }
  func.func @transform_2(%arg0: i32) -> (i32, i32) {
    %c0_i32 = arith.constant 0 : i32
    %c0_i32_0 = arith.constant 0 : i32
    %c0_i32_1 = arith.constant 0 : i32
    return %c0_i32, %c0_i32_0 : i32, i32
  }
  func.func @transform_3(%arg0: i32) -> (i32, i32) {
    %c0_i32 = arith.constant 0 : i32
    %c0_i32_0 = arith.constant 0 : i32
    %c0_i32_1 = arith.constant 0 : i32
    return %c0_i32, %c0_i32_0 : i32, i32
  }
  func.func @transform_4(%arg0: i32) -> (i32, i32) {
    %c0_i32 = arith.constant 0 : i32
    %c0_i32_0 = arith.constant 0 : i32
    %c0_i32_1 = arith.constant 0 : i32
    return %c0_i32, %c0_i32_0 : i32, i32
  }
  func.func @transform_5(%arg0: i32) -> (i32, i32, i32) {
    %c0_i32 = arith.constant 0 : i32
    %c0_i32_0 = arith.constant 0 : i32
    %c0_i32_1 = arith.constant 0 : i32
    return %arg0, %c0_i32, %c0_i32_0 : i32, i32, i32
  }
}

</mosaic_0001>

<llo_original>
// kernel: tpu_custom_call.1
$region0: #{tpu_custom_call.1}
  #allocation0 [shape = 'u32[]', space=smem, size = 0x4, offset = 0x4, fixed_abs, tag = 'smem constant byte address 0x4 - core index']
  #allocation1 [shape = 'u32[144,128]{1,0:T(1,128)}', space=vmem, size = 0x12000, scoped, tag = 'internal scratch']
  %s0 = inlined_call_operand.hbm [shape: f32[2,16,256], index: 0, kind: input, shape index: {}]
  %s1 = inlined_call_operand.hbm [shape: f32[256,256], index: 1, kind: input, shape index: {}]
  %s2 = inlined_call_operand.hbm [shape: f32[256,256], index: 2, kind: input, shape index: {}]
  %s3 = inlined_call_operand.hbm [shape: f32[16,16], index: 3, kind: input, shape index: {}]
  %s4 = inlined_call_operand.hbm [shape: f32[16,1], index: 4, kind: input, shape index: {}]
  %s5 = inlined_call_operand.hbm [shape: f32[2,16,256], index: 5, kind: output, shape index: {}]
  %s6 = sld [smem:[#allocation0]]
  $region73: #{tpu_custom_call.1} parent=0
    _
  %s8 = ssub.s32 1, %s6
  %s9 = scalar_select 0, %s8, %s6
  $region1: #{tpu_custom_call.1} parent=0
    #allocation2 [shape = 'u8[32768]{0}', space=vmem, size = 0x8000, scoped, tag = 'input window, operand 0']
    #allocation3 [shape = 's32[2]{0}', space=sflag, size = 0x8, scoped, tag = 'scoped memory for tpu_custom_call.1']
    #allocation4 [shape = 's32[2]{0}', space=sflag, size = 0x8, scoped, tag = 'scoped memory for tpu_custom_call.1']
    #allocation5 [shape = 'u8[262144]{0}', space=vmem, size = 0x40000, scoped, tag = 'input window, operand 1, single buffered']
    #allocation6 [shape = 's32[1]{0}', space=sflag, size = 0x4, scoped, tag = 'scoped memory for tpu_custom_call.1']
    #allocation7 [shape = 'u8[262144]{0}', space=vmem, size = 0x40000, scoped, tag = 'input window, operand 2, single buffered']
    #allocation8 [shape = 'u8[8192]{0}', space=vmem, size = 0x2000, scoped, tag = 'input window, operand 3, single buffered']
    #allocation9 [shape = 's32[1]{0}', space=sflag, size = 0x4, scoped, tag = 'scoped memory for tpu_custom_call.1']
    #allocation10 [shape = 'u8[8192]{0}', space=vmem, size = 0x2000, scoped, tag = 'input window, operand 4, single buffered']
    #allocation11 [shape = 'u8[32768]{0}', space=vmem, size = 0x8000, scoped, tag = 'output window, operand 0']
    %10 = vsyncpa [#allocation3], 0
    %s11 = scalar_lea.sflag [#allocation3], 1
    %12 = vsyncpa %s11, 0
    %13 = vsyncpa [#allocation6], 0
    %14 = vsyncpa [#allocation9], 0
    %15 = vsyncpa [#allocation4], 0
    %s16 = scalar_lea.sflag [#allocation4], 1
    %17 = vsyncpa %s16, 0
    loop: start=0, step=1, limit=4
    $region2: #{tpu_custom_call.1} parent=1 // loop_pre_header
      _
    $region3: #{tpu_custom_call.1} parent=1 // loop_header
      %s19 = sphi 0, %s23
      %p20 = scmp.ge.s32.totalorder %s19, 4
      %s29 = sphi 0, %s31
      %s32 = sphi 0, %s29
      %s33 = sphi 0, %s32
      %s49 = sphi 0, %s33
      %s53 = sphi 0, %s53
      %s55 = sphi 0, %s53
      %s56 = sphi 0, %s55
      %s70 = sphi 0, %s56
      %s74 = sphi 0, %s74
      %s76 = sphi 0, %s74
      %s77 = sphi 0, %s76
      %s91 = sphi 0, %s77
      %s95 = sphi 0, %s95
      %s97 = sphi 0, %s95
      %s98 = sphi 0, %s97
      %s112 = sphi 0, %s98
      %s116 = sphi 0, %s116
      %s118 = sphi 0, %s116
      %s119 = sphi 0, %s118
      %s133 = sphi 0, %s119
      %s139 = sphi 0, %s141
      %s142 = sphi 0, %s139
      %s143 = sphi 0, %s142
      %s159 = sphi 0, %s143
    $region4: #{tpu_custom_call.1} parent=1 // loop_header_branch
      %22 = sbr.rel (%p20) target = $region8
    $region5: #{tpu_custom_call.1} parent=1 // loop_body
      %s24 = ssub.s32 %s19, 1
      %s25 = ssub.s32 %s19, 2
      %s26 = sadd.s32 %s19, 1
      %s27 = ssub.s32 %s19, %s26
      %p28 = scmp.eq.s32.totalorder %s27, 0
      %s30 = sadd.s32 %s29, 1
      %s31 = scalar_select %p28, %s29, %s30
      %p34 = pneg %p28
      %p35 = scmp.eq.s32.totalorder %s19, 1
      %p36 = por %p34, %p35
      %p37 = scmp.ne.s32.totalorder %s29, %s32
      %p38 = scmp.eq.s32.totalorder %s19, 0
      %p39 = por %p37, %p38
      %p40 = scmp.ne.s32.totalorder %s29, %s32
      %p41 = scmp.eq.s32.totalorder %s24, 1
      %p42 = por %p40, %p41
      %p43 = scmp.ne.s32.totalorder %s32, %s33
      %p44 = scmp.eq.s32.totalorder %s24, 0
      %p45 = por %p43, %p44
      %p46 = scmp.ne.s32.totalorder %s32, %s33
      %p47 = scmp.eq.s32.totalorder %s25, 1
      %p48 = por %p46, %p47
      %p50 = scmp.ne.s32.totalorder %s33, %s49
      %p51 = scmp.eq.s32.totalorder %s25, 0
      %p52 = por %p50, %p51
      %s54 = sadd.s32 %s53, 1
      %p57 = scmp.eq.s32.totalorder %s19, 1
      %p58 = scmp.ne.s32.totalorder %s53, %s55
      %p59 = scmp.eq.s32.totalorder %s19, 0
      %p60 = por %p58, %p59
      %p61 = scmp.ne.s32.totalorder %s53, %s55
      %p62 = scmp.eq.s32.totalorder %s24, 1
      %p63 = por %p61, %p62
      %p64 = scmp.ne.s32.totalorder %s55, %s56
      %p65 = scmp.eq.s32.totalorder %s24, 0
      %p66 = por %p64, %p65
      %p67 = scmp.ne.s32.totalorder %s55, %s56
      %p68 = scmp.eq.s32.totalorder %s25, 1
      %p69 = por %p67, %p68
      %p71 = scmp.ne.s32.totalorder %s56, %s70
      %p72 = scmp.eq.s32.totalorder %s25, 0
      %p73 = por %p71, %p72
      %s75 = sadd.s32 %s74, 1
      %p78 = scmp.eq.s32.totalorder %s19, 1
      %p79 = scmp.ne.s32.totalorder %s74, %s76
      %p80 = scmp.eq.s32.totalorder %s19, 0
      %p81 = por %p79, %p80
      %p82 = scmp.ne.s32.totalorder %s74, %s76
      %p83 = scmp.eq.s32.totalorder %s24, 1
      %p84 = por %p82, %p83
      %p85 = scmp.ne.s32.totalorder %s76, %s77
      %p86 = scmp.eq.s32.totalorder %s24, 0
      %p87 = por %p85, %p86
      %p88 = scmp.ne.s32.totalorder %s76, %s77
      %p89 = scmp.eq.s32.totalorder %s25, 1
      %p90 = por %p88, %p89
      %p92 = scmp.ne.s32.totalorder %s77, %s91
      %p93 = scmp.eq.s32.totalorder %s25, 0
      %p94 = por %p92, %p93
      %s96 = sadd.s32 %s95, 1
      %p99 = scmp.eq.s32.totalorder %s19, 1
      %p100 = scmp.ne.s32.totalorder %s95, %s97
      %p101 = scmp.eq.s32.totalorder %s19, 0
      %p102 = por %p100, %p101
      %p103 = scmp.ne.s32.totalorder %s95, %s97
      %p104 = scmp.eq.s32.totalorder %s24, 1
      %p105 = por %p103, %p104
      %p106 = scmp.ne.s32.totalorder %s97, %s98
      %p107 = scmp.eq.s32.totalorder %s24, 0
      %p108 = por %p106, %p107
      %p109 = scmp.ne.s32.totalorder %s97, %s98
      %p110 = scmp.eq.s32.totalorder %s25, 1
      %p111 = por %p109, %p110
      %p113 = scmp.ne.s32.totalorder %s98, %s112
      %p114 = scmp.eq.s32.totalorder %s25, 0
      %p115 = por %p113, %p114
      %s117 = sadd.s32 %s116, 1
      %p120 = scmp.eq.s32.totalorder %s19, 1
      %p121 = scmp.ne.s32.totalorder %s116, %s118
      %p122 = scmp.eq.s32.totalorder %s19, 0
      %p123 = por %p121, %p122
      %p124 = scmp.ne.s32.totalorder %s116, %s118
      %p125 = scmp.eq.s32.totalorder %s24, 1
      %p126 = por %p124, %p125
      %p127 = scmp.ne.s32.totalorder %s118, %s119
      %p128 = scmp.eq.s32.totalorder %s24, 0
      %p129 = por %p127, %p128
      %p130 = scmp.ne.s32.totalorder %s118, %s119
      %p131 = scmp.eq.s32.totalorder %s25, 1
      %p132 = por %p130, %p131
      %p134 = scmp.ne.s32.totalorder %s119, %s133
      %p135 = scmp.eq.s32.totalorder %s25, 0
      %p136 = por %p134, %p135
      %s137 = ssub.s32 %s19, %s26
      %p138 = scmp.eq.s32.totalorder %s137, 0
      %s140 = sadd.s32 %s139, 1
      %s141 = scalar_select %p138, %s139, %s140
      %p144 = pneg %p138
      %p145 = scmp.eq.s32.totalorder %s19, 1
      %p146 = por %p144, %p145
      %p147 = scmp.ne.s32.totalorder %s139, %s142
      %p148 = scmp.eq.s32.totalorder %s19, 0
      %p149 = por %p147, %p148
      %p150 = scmp.ne.s32.totalorder %s139, %s142
      %p151 = scmp.eq.s32.totalorder %s24, 1
      %p152 = por %p150, %p151
      %p153 = scmp.ne.s32.totalorder %s142, %s143
      %p154 = scmp.eq.s32.totalorder %s24, 0
      %p155 = por %p153, %p154
      %p156 = scmp.ne.s32.totalorder %s142, %s143
      %p157 = scmp.eq.s32.totalorder %s25, 1
      %p158 = por %p156, %p157
      %p160 = scmp.ne.s32.totalorder %s143, %s159
      %p161 = scmp.eq.s32.totalorder %s25, 0
      %p162 = por %p160, %p161
      %p163 = scmp.le.s32.totalorder 1, %s19
      %p164 = scmp.lt.s32.totalorder %s19, 3
      %p165 = pnand %p163, %p164
      %p166 = pneg %p165
      // Predicated region
      $region9: #{tpu_custom_call.1} parent=5 // pred_check
        _
      $region10: #{tpu_custom_call.1} parent=5 // pred_check_branch
        %168 = sbr.rel (%p165) target = $region12
      $region11: #{tpu_custom_call.1} parent=5 // pred_region
        %s169 = ssub.s32 %s19, 1
        // Predicated region
        $region13: #{tpu_custom_call.1} parent=11 // pred_check
          %p170 = pneg %p66
        $region14: #{tpu_custom_call.1} parent=11 // pred_check_branch
          %172 = sbr.rel (%p170) target = $region16
        $region15: #{tpu_custom_call.1} parent=11 // pred_region
          %s174 = ssub.s32 8192, 8192
          %175 = vsyncadd [#allocation6], %s174
          %s176 = sshll.u32 [#allocation5], 4
          %s177 = int_to_ptr.vmem [resolvable:$true] %s176
          %182 = dma.hbm_to_vmem [thread:$0]  %s1, 8192, %s177, [#allocation6], 256, 256, 16
        $region16: #{tpu_custom_call.1} parent=11 // pred_fallthru
          _
        // Predicated region
        $region17: #{tpu_custom_call.1} parent=11 // pred_check
          %p183 = pneg %p87
        $region18: #{tpu_custom_call.1} parent=11 // pred_check_branch
          %185 = sbr.rel (%p183) target = $region20
        $region19: #{tpu_custom_call.1} parent=11 // pred_region
          %s187 = ssub.s32 8192, 8192
          %188 = vsyncadd [#allocation6], %s187
          %s189 = sshll.u32 [#allocation7], 4
          %s190 = int_to_ptr.vmem [resolvable:$true] %s189
          %195 = dma.hbm_to_vmem [thread:$0]  %s2, 8192, %s190, [#allocation6], 256, 256, 16
        $region20: #{tpu_custom_call.1} parent=11 // pred_fallthru
          _
        // Predicated region
        $region21: #{tpu_custom_call.1} parent=11 // pred_check
          %p196 = pneg %p108
        $region22: #{tpu_custom_call.1} parent=11 // pred_check_branch
          %198 = sbr.rel (%p196) target = $region24
        $region23: #{tpu_custom_call.1} parent=11 // pred_region
          %s200 = ssub.s32 256, 256
          %201 = vsyncadd [#allocation9], %s200
          %s202 = sshll.u32 [#allocation8], 4
          %s203 = int_to_ptr.vmem [resolvable:$true] %s202
          %208 = dma.hbm_to_vmem [thread:$0]  %s3, 256, %s203, [#allocation9], 128, 128, 8
        $region24: #{tpu_custom_call.1} parent=11 // pred_fallthru
          _
        // Predicated region
        $region25: #{tpu_custom_call.1} parent=11 // pred_check
          %p209 = pneg %p129
        $region26: #{tpu_custom_call.1} parent=11 // pred_check_branch
          %211 = sbr.rel (%p209) target = $region28
        $region27: #{tpu_custom_call.1} parent=11 // pred_region
          %s213 = ssub.s32 256, 256
          %214 = vsyncadd [#allocation9], %s213
          %s215 = sshll.u32 [#allocation10], 4
          %s216 = int_to_ptr.vmem [resolvable:$true] %s215
          %221 = dma.hbm_to_vmem [thread:$0]  %s4, 256, %s216, [#allocation9], 128, 128, 8
        $region28: #{tpu_custom_call.1} parent=11 // pred_fallthru
          _
      $region12: #{tpu_custom_call.1} parent=5 // pred_fallthru
        _
      %p222 = scmp.lt.s32.totalorder %s19, 2
      // Predicated region
      $region29: #{tpu_custom_call.1} parent=5 // pred_check
        %p223 = pneg %p222
      $region30: #{tpu_custom_call.1} parent=5 // pred_check_branch
        %225 = sbr.rel (%p223) target = $region32
      $region31: #{tpu_custom_call.1} parent=5 // pred_region
        // Predicated region
        $region33: #{tpu_custom_call.1} parent=31 // pred_check
          %p226 = pneg %p39
        $region34: #{tpu_custom_call.1} parent=31 // pred_check_branch
          %228 = sbr.rel (%p226) target = $region36
        $region35: #{tpu_custom_call.1} parent=31 // pred_region
          %s229 = sand.u32 %s29, 1
          %s230 = scalar_lea.sflag [#allocation3], %s229
          %s231 = sand.u32 %s29, 1
          %s232 = smul.addr %s231, 32
          %s233 = scalar_lea.vmem [#allocation2], %s232
          %s235 = ssub.s32 512, 512
          %236 = vsyncadd %s230, %s235
          %s237 = smul.addr %s19, 4
          %s238 = smul.addr %s237, 128
          %s239 = scalar_lea.hbm %s0, %s238
          %s240 = sshll.u32 %s233, 4
          %s241 = int_to_ptr.vmem [resolvable:$true] %s240
          %246 = dma.hbm_to_vmem [thread:$0]  %s239, 512, %s241, %s230, 256, 256, 16
        $region36: #{tpu_custom_call.1} parent=31 // pred_fallthru
          _
      $region32: #{tpu_custom_call.1} parent=5 // pred_fallthru
        _
      %p247 = scmp.le.s32.totalorder 1, %s19
      %p248 = scmp.lt.s32.totalorder %s19, 3
      %p249 = pnand %p247, %p248
      %p250 = pneg %p249
      // Predicated region
      $region37: #{tpu_custom_call.1} parent=5 // pred_check
        _
      $region38: #{tpu_custom_call.1} parent=5 // pred_check_branch
        %252 = sbr.rel (%p249) target = $region40
      $region39: #{tpu_custom_call.1} parent=5 // pred_region
        %s253 = ssub.s32 %s19, 1
        %s254 = sand.u32 %s32, 1
        %s255 = scalar_lea.sflag [#allocation3], %s254
        %s256 = sand.u32 %s32, 1
        %s257 = smul.addr %s256, 32
        %s258 = scalar_lea.vmem [#allocation2], %s257
        // Predicated region
        $region41: #{tpu_custom_call.1} parent=39 // pred_check
          %p259 = pneg %p45
        $region42: #{tpu_custom_call.1} parent=39 // pred_check_branch
          %261 = sbr.rel (%p259) target = $region44
        $region43: #{tpu_custom_call.1} parent=39 // pred_region
          %262 = dma.done %s255, 512
        $region44: #{tpu_custom_call.1} parent=39 // pred_fallthru
          _
        // Predicated region
        $region45: #{tpu_custom_call.1} parent=39 // pred_check
          %p263 = pneg %p66
        $region46: #{tpu_custom_call.1} parent=39 // pred_check_branch
          %265 = sbr.rel (%p263) target = $region48
        $region47: #{tpu_custom_call.1} parent=39 // pred_region
          %266 = dma.done [#allocation6], 8192
        $region48: #{tpu_custom_call.1} parent=39 // pred_fallthru
          _
        // Predicated region
        $region49: #{tpu_custom_call.1} parent=39 // pred_check
          %p267 = pneg %p87
        $region50: #{tpu_custom_call.1} parent=39 // pred_check_branch
          %269 = sbr.rel (%p267) target = $region52
        $region51: #{tpu_custom_call.1} parent=39 // pred_region
          %270 = dma.done [#allocation6], 8192
        $region52: #{tpu_custom_call.1} parent=39 // pred_fallthru
          _
        // Predicated region
        $region53: #{tpu_custom_call.1} parent=39 // pred_check
          %p271 = pneg %p108
        $region54: #{tpu_custom_call.1} parent=39 // pred_check_branch
          %273 = sbr.rel (%p271) target = $region56
        $region55: #{tpu_custom_call.1} parent=39 // pred_region
          %274 = dma.done [#allocation9], 256
        $region56: #{tpu_custom_call.1} parent=39 // pred_fallthru
          _
        // Predicated region
        $region57: #{tpu_custom_call.1} parent=39 // pred_check
          %p275 = pneg %p129
        $region58: #{tpu_custom_call.1} parent=39 // pred_check_branch
          %277 = sbr.rel (%p275) target = $region60
        $region59: #{tpu_custom_call.1} parent=39 // pred_region
          %278 = dma.done [#allocation9], 256
        $region60: #{tpu_custom_call.1} parent=39 // pred_fallthru
          _
        %s279 = sand.u32 %s32, 1
        %s280 = scalar_lea.sflag [#allocation3], %s279
        %s281 = sand.u32 %s32, 1
        %s282 = smul.addr %s281, 32
        %s283 = scalar_lea.vmem [#allocation2], %s282
        %p284 = pneg %p45
        %p285 = pneg %p42
        %p286 = pneg %p66
        %p287 = pneg %p63
        %p288 = pneg %p87
        %p289 = pneg %p84
        %p290 = pneg %p108
        %p291 = pneg %p105
        %p292 = pneg %p129
        %p293 = pneg %p126
        %p294 = pneg %p155
        %p295 = pneg %p152
        %s296 = sand.u32 %s142, 1
        %s297 = scalar_lea.sflag [#allocation4], %s296
        %s298 = sand.u32 %s142, 1
        %s299 = smul.addr %s298, 32
        %s300 = scalar_lea.vmem [#allocation11], %s299
        %v301 = vld [vmem:[%s258] sm:$0xff]
        %v302 = vld [vmem:[%s258 + $0x8] sm:$0xff]
        %v303 = vld [vmem:[%s258 + $0x10] sm:$0xff]
        %v304 = vld [vmem:[%s258 + $0x18] sm:$0xff]
        %v305 = vld [vmem:[#allocation5] sm:$0xff]
        %v306 = vld [vmem:[#allocation5 + $0x8] sm:$0xff]
        %v307 = vld [vmem:[#allocation5 + $0x10] sm:$0xff]
        %v308 = vld [vmem:[#allocation5 + $0x18] sm:$0xff]
        %v309 = vld [vmem:[#allocation5 + $0x20] sm:$0xff]
        %v310 = vld [vmem:[#allocation5 + $0x28] sm:$0xff]
        %v311 = vld [vmem:[#allocation5 + $0x30] sm:$0xff]
        %v312 = vld [vmem:[#allocation5 + $0x38] sm:$0xff]
        %v313 = vld [vmem:[#allocation5 + $0x40] sm:$0xff]
        %v314 = vld [vmem:[#allocation5 + $0x48] sm:$0xff]
        %v315 = vld [vmem:[#allocation5 + $0x50] sm:$0xff]
        %v316 = vld [vmem:[#allocation5 + $0x58] sm:$0xff]
        %v317 = vld [vmem:[#allocation5 + $0x60] sm:$0xff]
        %v318 = vld [vmem:[#allocation5 + $0x68] sm:$0xff]
        %v319 = vld [vmem:[#allocation5 + $0x70] sm:$0xff]
        %v320 = vld [vmem:[#allocation5 + $0x78] sm:$0xff]
        %v321 = vld [vmem:[#allocation5 + $0x80] sm:$0xff]
        %v322 = vld [vmem:[#allocation5 + $0x88] sm:$0xff]
        %v323 = vld [vmem:[#allocation5 + $0x90] sm:$0xff]
        %v324 = vld [vmem:[#allocation5 + $0x98] sm:$0xff]
        %v325 = vld [vmem:[#allocation5 + $0xa0] sm:$0xff]
        %v326 = vld [vmem:[#allocation5 + $0xa8] sm:$0xff]
        %v327 = vld [vmem:[#allocation5 + $0xb0] sm:$0xff]
        %v328 = vld [vmem:[#allocation5 + $0xb8] sm:$0xff]
        %v329 = vld [vmem:[#allocation5 + $0xc0] sm:$0xff]
        %v330 = vld [vmem:[#allocation5 + $0xc8] sm:$0xff]
        %v331 = vld [vmem:[#allocation5 + $0xd0] sm:$0xff]
        %v332 = vld [vmem:[#allocation5 + $0xd8] sm:$0xff]
        %v333 = vld [vmem:[#allocation5 + $0xe0] sm:$0xff]
        %v334 = vld [vmem:[#allocation5 + $0xe8] sm:$0xff]
        %v335 = vld [vmem:[#allocation5 + $0xf0] sm:$0xff]
        %v336 = vld [vmem:[#allocation5 + $0xf8] sm:$0xff]
        %v337 = vld [vmem:[#allocation5 + $0x100] sm:$0xff]
        %v338 = vld [vmem:[#allocation5 + $0x108] sm:$0xff]
        %v339 = vld [vmem:[#allocation5 + $0x110] sm:$0xff]
        %v340 = vld [vmem:[#allocation5 + $0x118] sm:$0xff]
        %v341 = vld [vmem:[#allocation5 + $0x120] sm:$0xff]
        %v342 = vld [vmem:[#allocation5 + $0x128] sm:$0xff]
        %v343 = vld [vmem:[#allocation5 + $0x130] sm:$0xff]
        %v344 = vld [vmem:[#allocation5 + $0x138] sm:$0xff]
        %v345 = vld [vmem:[#allocation5 + $0x140] sm:$0xff]
        %v346 = vld [vmem:[#allocation5 + $0x148] sm:$0xff]
        %v347 = vld [vmem:[#allocation5 + $0x150] sm:$0xff]
        %v348 = vld [vmem:[#allocation5 + $0x158] sm:$0xff]
        %v349 = vld [vmem:[#allocation5 + $0x160] sm:$0xff]
        %v350 = vld [vmem:[#allocation5 + $0x168] sm:$0xff]
        %v351 = vld [vmem:[#allocation5 + $0x170] sm:$0xff]
        %v352 = vld [vmem:[#allocation5 + $0x178] sm:$0xff]
        %v353 = vld [vmem:[#allocation5 + $0x180] sm:$0xff]
        %v354 = vld [vmem:[#allocation5 + $0x188] sm:$0xff]
        %v355 = vld [vmem:[#allocation5 + $0x190] sm:$0xff]
        %v356 = vld [vmem:[#allocation5 + $0x198] sm:$0xff]
        %v357 = vld [vmem:[#allocation5 + $0x1a0] sm:$0xff]
        %v358 = vld [vmem:[#allocation5 + $0x1a8] sm:$0xff]
        %v359 = vld [vmem:[#allocation5 + $0x1b0] sm:$0xff]
        %v360 = vld [vmem:[#allocation5 + $0x1b8] sm:$0xff]
        %v361 = vld [vmem:[#allocation5 + $0x1c0] sm:$0xff]
        %v362 = vld [vmem:[#allocation5 + $0x1c8] sm:$0xff]
        %v363 = vld [vmem:[#allocation5 + $0x1d0] sm:$0xff]
        %v364 = vld [vmem:[#allocation5 + $0x1d8] sm:$0xff]
        %v365 = vld [vmem:[#allocation5 + $0x1e0] sm:$0xff]
        %v366 = vld [vmem:[#allocation5 + $0x1e8] sm:$0xff]
        %v367 = vld [vmem:[#allocation5 + $0x1f0] sm:$0xff]
        %v368 = vld [vmem:[#allocation5 + $0x1f8] sm:$0xff]
        %369 = vmatprep.subr.mxu0 %v306
        %370 = vmatpush1.msra.mxu0 %v305
        %371 = vmatprep.subr.mxu0 %v308
        %372 = vmatpush1.msra.mxu0 %v307
        %373 = vmatprep.subr.mxu0 %v310
        %374 = vmatpush1.msra.mxu0 %v309
        %375 = vmatprep.subr.mxu0 %v312
        %376 = vmatpush1.msra.mxu0 %v311
        %377 = vmatprep.subr.mxu0 %v314
        %378 = vmatpush1.msra.mxu0 %v313
        %379 = vmatprep.subr.mxu0 %v316
        %380 = vmatpush1.msra.mxu0 %v315
        %381 = vmatprep.subr.mxu0 %v318
        %382 = vmatpush1.msra.mxu0 %v317
        %383 = vmatprep.subr.mxu0 %v320
        %384 = vmatpush1.msra.mxu0 %v319
        %385 = vmatprep.subr.mxu0 %v322
        %386 = vmatpush1.msra.mxu0 %v321
        %387 = vmatprep.subr.mxu0 %v324
        %388 = vmatpush1.msra.mxu0 %v323
        %389 = vmatprep.subr.mxu0 %v326
        %390 = vmatpush1.msra.mxu0 %v325
        %391 = vmatprep.subr.mxu0 %v328
        %392 = vmatpush1.msra.mxu0 %v327
        %393 = vmatprep.subr.mxu0 %v330
        %394 = vmatpush1.msra.mxu0 %v329
        %395 = vmatprep.subr.mxu0 %v332
        %396 = vmatpush1.msra.mxu0 %v331
        %397 = vmatprep.subr.mxu0 %v334
        %398 = vmatpush1.msra.mxu0 %v333
        %399 = vmatprep.subr.mxu0 %v336
        %400 = vmatpush1.msra.mxu0 %v335
        %401 = vmatprep.subr.mxu0 %v338
        %402 = vmatpush1.msra.mxu0 %v337
        %403 = vmatprep.subr.mxu0 %v340
        %404 = vmatpush1.msra.mxu0 %v339
        %405 = vmatprep.subr.mxu0 %v342
        %406 = vmatpush1.msra.mxu0 %v341
        %407 = vmatprep.subr.mxu0 %v344
        %408 = vmatpush1.msra.mxu0 %v343
        %409 = vmatprep.subr.mxu0 %v346
        %410 = vmatpush1.msra.mxu0 %v345
        %411 = vmatprep.subr.mxu0 %v348
        %412 = vmatpush1.msra.mxu0 %v347
        %413 = vmatprep.subr.mxu0 %v350
        %414 = vmatpush1.msra.mxu0 %v349
        %415 = vmatprep.subr.mxu0 %v352
        %416 = vmatpush1.msra.mxu0 %v351
        %417 = vmatprep.subr.mxu0 %v354
        %418 = vmatpush1.msra.mxu0 %v353
        %419 = vmatprep.subr.mxu0 %v356
        %420 = vmatpush1.msra.mxu0 %v355
        %421 = vmatprep.subr.mxu0 %v358
        %422 = vmatpush1.msra.mxu0 %v357
        %423 = vmatprep.subr.mxu0 %v360
        %424 = vmatpush1.msra.mxu0 %v359
        %425 = vmatprep.subr.mxu0 %v362
        %426 = vmatpush1.msra.mxu0 %v361
        %427 = vmatprep.subr.mxu0 %v364
        %428 = vmatpush1.msra.mxu0 %v363
        %429 = vmatprep.subr.mxu0 %v366
        %430 = vmatpush1.msra.mxu0 %v365
        %431 = vmatprep.subr.mxu0 %v368
        %432 = vmatpush1.msra.mxu0 %v367
        %433 = vmatprep.mubr.f32.mxu0 %v302
        %434 = vmatmul.mubr.f32.gmra.mrb[0].mxu0 %v301
        %v435 = vpop.f32.mrb[0].mxu0
        %v436 = vadd.f32 0.0, %v435
        %v437 = vpop.f32.mrb[0].mxu0
        %v438 = vadd.f32 0.0, %v437
        %439 = vmatprep.mubr.f32.mxu0 %v304
        %440 = vmatmul.mubr.f32.gmra.mrb[0].mxu0 %v303
        %v441 = vpop.f32.mrb[0].mxu0
        %v442 = vadd.f32 0.0, %v441
        %v443 = vpop.f32.mrb[0].mxu0
        %v444 = vadd.f32 0.0, %v443
        %445 = vdwg.mxu0
        %v446 = vld [vmem:[#allocation8] sm:$0xff]
        %v447 = vld [vmem:[#allocation8 + $0x8] sm:$0xff]
        %v448 = vld [vmem:[#allocation10] sm:$0xff]
        %v449 = vld [vmem:[#allocation10 + $0x8] sm:$0xff]
        %451 = vset.pattern.permute.xlu0 0
        %452 = vperm.xlu0 %451, %v448
        %v453 = vpop.permute.xlu0 %452
        %456 = vset.pattern.permute.xlu0 0
        %457 = vperm.xlu0 %456, %v449
        %v458 = vpop.permute.xlu0 %457
        %vm460 = vcmask 130048
        %v462 = vsel %vm460, %v446, 0
        %v465 = vsel %vm460, %v447, 0
        %467 = vmatprep.subr.mxu0 %v438
        %468 = vmatpush1.msra.mxu0 %v436
        %469 = vmatprep.subr.mxu0 %v444
        %470 = vmatpush1.msra.mxu0 %v442
        %471 = vmatprep.subr.mxu0 0.0
        %472 = vmatpush1.msra.mxu0 0.0
        %473 = vmatprep.subr.mxu0 0.0
        %474 = vmatpush1.msra.mxu0 0.0
        %475 = vmatprep.subr.mxu0 0.0
        %476 = vmatpush1.msra.mxu0 0.0
        %477 = vmatprep.subr.mxu0 0.0
        %478 = vmatpush1.msra.mxu0 0.0
        %479 = vmatprep.subr.mxu0 0.0
        %480 = vmatpush1.msra.mxu0 0.0
        %481 = vmatprep.subr.mxu0 0.0
        %482 = vmatpush1.msra.mxu0 0.0
        %483 = vmatprep.subr.mxu0 0.0
        %484 = vmatpush1.msra.mxu0 0.0
        %485 = vmatprep.subr.mxu0 0.0
        %486 = vmatpush1.msra.mxu0 0.0
        %487 = vmatprep.subr.mxu0 0.0
        %488 = vmatpush1.msra.mxu0 0.0
        %489 = vmatprep.subr.mxu0 0.0
        %490 = vmatpush1.msra.mxu0 0.0
        %491 = vmatprep.subr.mxu0 0.0
        %492 = vmatpush1.msra.mxu0 0.0
        %493 = vmatprep.subr.mxu0 0.0
        %494 = vmatpush1.msra.mxu0 0.0
        %495 = vmatprep.subr.mxu0 0.0
        %496 = vmatpush1.msra.mxu0 0.0
        %497 = vmatprep.subr.mxu0 0.0
        %498 = vmatpush1.msra.mxu0 0.0
        %499 = vmatprep.subr.mxu0 0.0
        %500 = vmatpush1.msra.mxu0 0.0
        %501 = vmatprep.subr.mxu0 0.0
        %502 = vmatpush1.msra.mxu0 0.0
        %503 = vmatprep.subr.mxu0 0.0
        %504 = vmatpush1.msra.mxu0 0.0
        %505 = vmatprep.subr.mxu0 0.0
        %506 = vmatpush1.msra.mxu0 0.0
        %507 = vmatprep.subr.mxu0 0.0
        %508 = vmatpush1.msra.mxu0 0.0
        %509 = vmatprep.subr.mxu0 0.0
        %510 = vmatpush1.msra.mxu0 0.0
        %511 = vmatprep.subr.mxu0 0.0
        %512 = vmatpush1.msra.mxu0 0.0
        %513 = vmatprep.subr.mxu0 0.0
        %514 = vmatpush1.msra.mxu0 0.0
        %515 = vmatprep.subr.mxu0 0.0
        %516 = vmatpush1.msra.mxu0 0.0
        %517 = vmatprep.subr.mxu0 0.0
        %518 = vmatpush1.msra.mxu0 0.0
        %519 = vmatprep.subr.mxu0 0.0
        %520 = vmatpush1.msra.mxu0 0.0
        %521 = vmatprep.subr.mxu0 0.0
        %522 = vmatpush1.msra.mxu0 0.0
        %523 = vmatprep.subr.mxu0 0.0
        %524 = vmatpush1.msra.mxu0 0.0
        %525 = vmatprep.subr.mxu0 0.0
        %526 = vmatpush1.msra.mxu0 0.0
        %527 = vmatprep.subr.mxu0 0.0
        %528 = vmatpush1.msra.mxu0 0.0
        %529 = vmatprep.subr.mxu0 0.0
        %530 = vmatpush1.msra.mxu0 0.0
        %531 = vmatprep.mubr.f32.mxu0 0.0
        %532 = vmatmul.mubr.f32.gmra.mrb[0].mxu0 %v462
        %v533 = vpop.f32.mrb[0].mxu0
        %v534 = vadd.f32 %v453, %v533
        %v535 = vpop.f32.mrb[0].mxu0
        %v536 = vadd.f32 %v453, %v535
        %537 = vmatprep.mubr.f32.mxu0 0.0
        %538 = vmatmul.mubr.f32.gmra.mrb[0].mxu0 %v465
        %v539 = vpop.f32.mrb[0].mxu0
        %v540 = vadd.f32 %v458, %v539
        %v541 = vpop.f32.mrb[0].mxu0
        %v542 = vadd.f32 %v458, %v541
        %543 = vdwg.mxu0
        %v544 = vmax.f32 %v534, 0.0
        %v545 = vmax.f32 %v536, 0.0
        %v546 = vmax.f32 %v540, 0.0
        %v547 = vmax.f32 %v542, 0.0
        %v548 = vld [vmem:[#allocation7] sm:$0xff]
        %v549 = vld [vmem:[#allocation7 + $0x8] sm:$0xff]
        %v550 = vld [vmem:[#allocation7 + $0x10] sm:$0xff]
        %v551 = vld [vmem:[#allocation7 + $0x18] sm:$0xff]
        %v552 = vld [vmem:[#allocation7 + $0x20] sm:$0xff]
        %v553 = vld [vmem:[#allocation7 + $0x28] sm:$0xff]
        %v554 = vld [vmem:[#allocation7 + $0x30] sm:$0xff]
        %v555 = vld [vmem:[#allocation7 + $0x38] sm:$0xff]
        %v556 = vld [vmem:[#allocation7 + $0x40] sm:$0xff]
        %v557 = vld [vmem:[#allocation7 + $0x48] sm:$0xff]
        %v558 = vld [vmem:[#allocation7 + $0x50] sm:$0xff]
        %v559 = vld [vmem:[#allocation7 + $0x58] sm:$0xff]
        %v560 = vld [vmem:[#allocation7 + $0x60] sm:$0xff]
        %v561 = vld [vmem:[#allocation7 + $0x68] sm:$0xff]
        %v562 = vld [vmem:[#allocation7 + $0x70] sm:$0xff]
        %v563 = vld [vmem:[#allocation7 + $0x78] sm:$0xff]
        %v564 = vld [vmem:[#allocation7 + $0x80] sm:$0xff]
        %v565 = vld [vmem:[#allocation7 + $0x88] sm:$0xff]
        %v566 = vld [vmem:[#allocation7 + $0x90] sm:$0xff]
        %v567 = vld [vmem:[#allocation7 + $0x98] sm:$0xff]
        %v568 = vld [vmem:[#allocation7 + $0xa0] sm:$0xff]
        %v569 = vld [vmem:[#allocation7 + $0xa8] sm:$0xff]
        %v570 = vld [vmem:[#allocation7 + $0xb0] sm:$0xff]
        %v571 = vld [vmem:[#allocation7 + $0xb8] sm:$0xff]
        %v572 = vld [vmem:[#allocation7 + $0xc0] sm:$0xff]
        %v573 = vld [vmem:[#allocation7 + $0xc8] sm:$0xff]
        %v574 = vld [vmem:[#allocation7 + $0xd0] sm:$0xff]
        %v575 = vld [vmem:[#allocation7 + $0xd8] sm:$0xff]
        %v576 = vld [vmem:[#allocation7 + $0xe0] sm:$0xff]
        %v577 = vld [vmem:[#allocation7 + $0xe8] sm:$0xff]
        %v578 = vld [vmem:[#allocation7 + $0xf0] sm:$0xff]
        %v579 = vld [vmem:[#allocation7 + $0xf8] sm:$0xff]
        %v580 = vld [vmem:[#allocation7 + $0x100] sm:$0xff]
        %v581 = vld [vmem:[#allocation7 + $0x108] sm:$0xff]
        %v582 = vld [vmem:[#allocation7 + $0x110] sm:$0xff]
        %v583 = vld [vmem:[#allocation7 + $0x118] sm:$0xff]
        %v584 = vld [vmem:[#allocation7 + $0x120] sm:$0xff]
        %v585 = vld [vmem:[#allocation7 + $0x128] sm:$0xff]
        %v586 = vld [vmem:[#allocation7 + $0x130] sm:$0xff]
        %v587 = vld [vmem:[#allocation7 + $0x138] sm:$0xff]
        %v588 = vld [vmem:[#allocation7 + $0x140] sm:$0xff]
        %v589 = vld [vmem:[#allocation7 + $0x148] sm:$0xff]
        %v590 = vld [vmem:[#allocation7 + $0x150] sm:$0xff]
        %v591 = vld [vmem:[#allocation7 + $0x158] sm:$0xff]
        %v592 = vld [vmem:[#allocation7 + $0x160] sm:$0xff]
        %v593 = vld [vmem:[#allocation7 + $0x168] sm:$0xff]
        %v594 = vld [vmem:[#allocation7 + $0x170] sm:$0xff]
        %v595 = vld [vmem:[#allocation7 + $0x178] sm:$0xff]
        %v596 = vld [vmem:[#allocation7 + $0x180] sm:$0xff]
        %v597 = vld [vmem:[#allocation7 + $0x188] sm:$0xff]
        %v598 = vld [vmem:[#allocation7 + $0x190] sm:$0xff]
        %v599 = vld [vmem:[#allocation7 + $0x198] sm:$0xff]
        %v600 = vld [vmem:[#allocation7 + $0x1a0] sm:$0xff]
        %v601 = vld [vmem:[#allocation7 + $0x1a8] sm:$0xff]
        %v602 = vld [vmem:[#allocation7 + $0x1b0] sm:$0xff]
        %v603 = vld [vmem:[#allocation7 + $0x1b8] sm:$0xff]
        %v604 = vld [vmem:[#allocation7 + $0x1c0] sm:$0xff]
        %v605 = vld [vmem:[#allocation7 + $0x1c8] sm:$0xff]
        %v606 = vld [vmem:[#allocation7 + $0x1d0] sm:$0xff]
        %v607 = vld [vmem:[#allocation7 + $0x1d8] sm:$0xff]
        %v608 = vld [vmem:[#allocation7 + $0x1e0] sm:$0xff]
        %v609 = vld [vmem:[#allocation7 + $0x1e8] sm:$0xff]
        %v610 = vld [vmem:[#allocation7 + $0x1f0] sm:$0xff]
        %v611 = vld [vmem:[#allocation7 + $0x1f8] sm:$0xff]
        %612 = vmatprep.subr.mxu0 %v549
        %613 = vmatpush1.msra.mxu0 %v548
        %614 = vmatprep.subr.mxu0 %v551
        %615 = vmatpush1.msra.mxu0 %v550
        %616 = vmatprep.subr.mxu0 %v553
        %617 = vmatpush1.msra.mxu0 %v552
        %618 = vmatprep.subr.mxu0 %v555
        %619 = vmatpush1.msra.mxu0 %v554
        %620 = vmatprep.subr.mxu0 %v557
        %621 = vmatpush1.msra.mxu0 %v556
        %622 = vmatprep.subr.mxu0 %v559
        %623 = vmatpush1.msra.mxu0 %v558
        %624 = vmatprep.subr.mxu0 %v561
        %625 = vmatpush1.msra.mxu0 %v560
        %626 = vmatprep.subr.mxu0 %v563
        %627 = vmatpush1.msra.mxu0 %v562
        %628 = vmatprep.subr.mxu0 %v565
        %629 = vmatpush1.msra.mxu0 %v564
        %630 = vmatprep.subr.mxu0 %v567
        %631 = vmatpush1.msra.mxu0 %v566
        %632 = vmatprep.subr.mxu0 %v569
        %633 = vmatpush1.msra.mxu0 %v568
        %634 = vmatprep.subr.mxu0 %v571
        %635 = vmatpush1.msra.mxu0 %v570
        %636 = vmatprep.subr.mxu0 %v573
        %637 = vmatpush1.msra.mxu0 %v572
        %638 = vmatprep.subr.mxu0 %v575
        %639 = vmatpush1.msra.mxu0 %v574
        %640 = vmatprep.subr.mxu0 %v577
        %641 = vmatpush1.msra.mxu0 %v576
        %642 = vmatprep.subr.mxu0 %v579
        %643 = vmatpush1.msra.mxu0 %v578
        %644 = vmatprep.subr.mxu0 %v581
        %645 = vmatpush1.msra.mxu0 %v580
        %646 = vmatprep.subr.mxu0 %v583
        %647 = vmatpush1.msra.mxu0 %v582
        %648 = vmatprep.subr.mxu0 %v585
        %649 = vmatpush1.msra.mxu0 %v584
        %650 = vmatprep.subr.mxu0 %v587
        %651 = vmatpush1.msra.mxu0 %v586
        %652 = vmatprep.subr.mxu0 %v589
        %653 = vmatpush1.msra.mxu0 %v588
        %654 = vmatprep.subr.mxu0 %v591
        %655 = vmatpush1.msra.mxu0 %v590
        %656 = vmatprep.subr.mxu0 %v593
        %657 = vmatpush1.msra.mxu0 %v592
        %658 = vmatprep.subr.mxu0 %v595
        %659 = vmatpush1.msra.mxu0 %v594
        %660 = vmatprep.subr.mxu0 %v597
        %661 = vmatpush1.msra.mxu0 %v596
        %662 = vmatprep.subr.mxu0 %v599
        %663 = vmatpush1.msra.mxu0 %v598
        %664 = vmatprep.subr.mxu0 %v601
        %665 = vmatpush1.msra.mxu0 %v600
        %666 = vmatprep.subr.mxu0 %v603
        %667 = vmatpush1.msra.mxu0 %v602
        %668 = vmatprep.subr.mxu0 %v605
        %669 = vmatpush1.msra.mxu0 %v604
        %670 = vmatprep.subr.mxu0 %v607
        %671 = vmatpush1.msra.mxu0 %v606
        %672 = vmatprep.subr.mxu0 %v609
        %673 = vmatpush1.msra.mxu0 %v608
        %674 = vmatprep.subr.mxu0 %v611
        %675 = vmatpush1.msra.mxu0 %v610
        %676 = vmatprep.mubr.f32.mxu0 %v545
        %677 = vmatmul.mubr.f32.gmra.mrb[0].mxu0 %v544
        %v678 = vpop.f32.mrb[0].mxu0
        %v679 = vadd.f32 0.0, %v678
        %v680 = vpop.f32.mrb[0].mxu0
        %v681 = vadd.f32 0.0, %v680
        %682 = vmatprep.mubr.f32.mxu0 %v547
        %683 = vmatmul.mubr.f32.gmra.mrb[0].mxu0 %v546
        %v684 = vpop.f32.mrb[0].mxu0
        %v685 = vadd.f32 0.0, %v684
        %v686 = vpop.f32.mrb[0].mxu0
        %v687 = vadd.f32 0.0, %v686
        %688 = vdwg.mxu0
        %v689 = vadd.f32 %v301, %v679
        %v690 = vadd.f32 %v302, %v681
        %v691 = vadd.f32 %v303, %v685
        %v692 = vadd.f32 %v304, %v687
        %693 = vst [vmem:[%s300] sm:$0xff] %v689
        %694 = vst [vmem:[%s300 + $0x8] sm:$0xff] %v690
        %695 = vst [vmem:[%s300 + $0x10] sm:$0xff] %v691
        %696 = vst [vmem:[%s300 + $0x18] sm:$0xff] %v692
        %s697 = sand.u32 %s142, 1
        %s698 = scalar_lea.sflag [#allocation4], %s697
        %s699 = sand.u32 %s142, 1
        %s700 = smul.addr %s699, 32
        %s701 = scalar_lea.vmem [#allocation11], %s700
        // Predicated region
        $region61: #{tpu_custom_call.1} parent=39 // pred_check
          %p702 = pneg %p152
        $region62: #{tpu_custom_call.1} parent=39 // pred_check_branch
          %704 = sbr.rel (%p702) target = $region64
        $region63: #{tpu_custom_call.1} parent=39 // pred_region
          %s706 = ssub.s32 512, 512
          %707 = vsyncadd %s698, %s706
          %s708 = smul.addr %s24, 4
          %s709 = smul.addr %s708, 128
          %s710 = scalar_lea.hbm %s5, %s709
          %s711 = sshll.u32 %s701, 4
          %s712 = int_to_ptr.vmem [resolvable:$true] %s711
          %717 = dma.vmem_to_hbm [thread:$0]  %s712, 512, %s710, %s698, 256, 256, 16
        $region64: #{tpu_custom_call.1} parent=39 // pred_fallthru
          _
      $region40: #{tpu_custom_call.1} parent=5 // pred_fallthru
        _
      %p718 = scmp.le.s32.totalorder 2, %s19
      // Predicated region
      $region65: #{tpu_custom_call.1} parent=5 // pred_check
        %p719 = pneg %p718
      $region66: #{tpu_custom_call.1} parent=5 // pred_check_branch
        %721 = sbr.rel (%p719) target = $region68
      $region67: #{tpu_custom_call.1} parent=5 // pred_region
        %s722 = ssub.s32 %s19, 2
        // Predicated region
        $region69: #{tpu_custom_call.1} parent=67 // pred_check
          %p723 = pneg %p158
        $region70: #{tpu_custom_call.1} parent=67 // pred_check_branch
          %725 = sbr.rel (%p723) target = $region72
        $region71: #{tpu_custom_call.1} parent=67 // pred_region
          %s726 = sand.u32 %s143, 1
          %s727 = scalar_lea.sflag [#allocation4], %s726
          %s728 = sand.u32 %s143, 1
          %s729 = smul.addr %s728, 32
          %s730 = scalar_lea.vmem [#allocation11], %s729
          %731 = dma.done %s727, 512
        $region72: #{tpu_custom_call.1} parent=67 // pred_fallthru
          _
      $region68: #{tpu_custom_call.1} parent=5 // pred_fallthru
        _
    $region6: #{tpu_custom_call.1} parent=1 // loop_footer
      %s23 = sadd.s32 1, %s19
    $region7: #{tpu_custom_call.1} parent=1 // loop_footer_branch
      %18 = sbr.rel target = $region3
    $region8: #{tpu_custom_call.1} parent=1 // loop_exit
      _
    %732 = vsyncpa [#allocation3], 1
    %s733 = scalar_lea.sflag [#allocation3], 1
    %734 = vsyncpa %s733, 1
    %735 = vsyncpa [#allocation6], 1
    %736 = vsyncpa [#allocation9], 1
    %737 = vsyncpa [#allocation4], 1
    %s738 = scalar_lea.sflag [#allocation4], 1
    %739 = vsyncpa %s738, 1

</llo_original>
